<compile_context>
chip_gen: v7x
topology: tpu7x:2x2x1
jax: 0.10.0
libtpu: 0.0.40
codegen_flags: <defaults>
</compile_context>

<pallas_src>
import functools

import jax
import jax.numpy as jnp
from jax.experimental import pallas as pl
from jax.experimental.pallas import tpu as pltpu


# ----------------------------------------------------------------------------- kernel


def _attn_body(q_ref, k_ref, v_ref, x_ref, gamma_ref, out_ref, attn_ref, mask=None):
    # q_ref   : (Cqp, TQ)  bf16   query channels for this row tile
    # k_ref   : (Cqp, Np)  bf16   all keys   (resident across qi)
    # v_ref   : (C,   Np)  bf16   all values (resident across qi)
    # x_ref   : (C,   TQ)  f32    residual input columns for this tile
    # gamma_ref : (1, 1)   f32    SMEM scalar
    # out_ref : (C,  TQ)   f32
    # attn_ref: (TQ, Np)   bf16
    #
    # scores[t, n] = sum_c q[c, t] * k[c, n]  -- contraction on the shared
    # channel axis (no explicit transpose); bf16 operands, f32 accumulation.
    scores = jax.lax.dot_general(
        q_ref[...], k_ref[...],
        (((0,), (0,)), ((), ())),
        preferred_element_type=jnp.float32)                       # (TQ, Np) f32
    if mask is not None:
        scores = scores + mask                                     # additive 0 / -1e30

    # Numerically stable softmax over the key axis (f32 on VPU; exp/recip on EUP).
    m = jnp.max(scores, axis=-1, keepdims=True)
    e = jnp.exp(scores - m)
    attn = e * pl.reciprocal(jnp.sum(e, axis=-1, keepdims=True), approx=True)
    attn_bf16 = attn.astype(jnp.bfloat16)
    attn_ref[...] = attn_bf16                                      # bf16 writeback

    # out[c, t] = sum_n v[c, n] * attn[t, n]  -- again a contraction, so no
    # transpose of the attention block is materialized.
    out_t = jax.lax.dot_general(
        v_ref[...], attn_bf16,
        (((1,), (1,)), ((), ())),
        preferred_element_type=jnp.float32)                        # (C, TQ) f32

    out_ref[...] = (gamma_ref[0, 0] * out_t + x_ref[...]).astype(out_ref.dtype)


def _attn_kernel_masked(q_ref, k_ref, v_ref, x_ref, mask_ref, gamma_ref,
                        out_ref, attn_ref):
    _attn_body(q_ref, k_ref, v_ref, x_ref, gamma_ref, out_ref, attn_ref,
               mask=mask_ref[...])


def _attn_kernel(q_ref, k_ref, v_ref, x_ref, gamma_ref, out_ref, attn_ref):
    _attn_body(q_ref, k_ref, v_ref, x_ref, gamma_ref, out_ref, attn_ref, mask=None)


# ----------------------------------------------------------------------------- sizing


def _device_kind():
    try:
        return jax.devices()[0].device_kind.lower()
    except Exception:
        return ""


def _vmem_block_bytes(C, Cqp, Np, tq, masked):
    bf, f32 = 2, 4
    per_step = (Cqp * tq * bf        # q tile
                + Cqp * Np * bf      # k (resident)
                + C * Np * bf        # v (resident)
                + C * tq * f32       # x tile
                + C * tq * f32       # out tile
                + tq * Np * bf)      # attn tile
    total = 2 * per_step             # double-buffered by the pipeline
    if masked:
        total += 2 * Np * f32        # additive key mask
    return total


def _vmem_cap():
    kind = _device_kind()
    if "v7" in kind:
        return 48 << 20              # v7x: 64 MiB physical VMEM per TC
    return 100 << 20                 # v5e / v6e: 128 MiB physical


def _pick_tq(C, Cqp, Np, masked):
    kind = _device_kind()
    if ("v6" in kind or "v7" in kind) and Np % 256 == 0:
        # 2x256x256 MXU: a 256-row query tile doubles M utilization -- only if
        # the VMEM estimate fits (matters on v7x's 64 MiB).
        if _vmem_block_bytes(C, Cqp, Np, 256, masked) + (4 << 20) <= _vmem_cap():
            return 256
    return 128                       # v5e (4x128x128 MXU) or VMEM-constrained


# ----------------------------------------------------------------------------- wrapper


def self_attention(x, params, *, tq=None):
    """x: (B, C, W, H) float32.  Returns (out (B,C,W,H), attention (B,N,N))."""
    B, C, W, H = x.shape
    N = W * H
    Np = max(128, ((N + 127) // 128) * 128)   # lane-dense stores / MXU-friendly
    masked = Np != N

    Cq = params["wq"].shape[0]
    Cqp = ((Cq + 15) // 16) * 16              # full bf16 sublane packing

    if tq is None:
        tq = _pick_tq(C, Cqp, Np, masked)
    assert Np % tq == 0

    x_flat = x.reshape(B, C, N)
    if masked:
        x_flat = jnp.pad(x_flat, ((0, 0), (0, 0), (0, Np - N)))

    def pad_rows(a, rows):
        return a if a.shape[0] == rows else jnp.pad(a, ((0, rows - a.shape[0]), (0, 0)))

    wq = pad_rows(params["wq"], Cqp)
    bq = pad_rows(params["bq"], Cqp)
    wk = pad_rows(params["wk"], Cqp)
    bk = pad_rows(params["bk"], Cqp)

    # 1x1-conv projections hoisted out of the kernel (full-efficiency XLA
    # matmuls, no per-batch qi==0 bubble, no resident f32 x slab in VMEM);
    # results fed to the kernel as bf16 MXU operands.
    q_all = (jnp.einsum("oc,bcn->bon", wq, x_flat) + bq[None]).astype(jnp.bfloat16)
    k_all = (jnp.einsum("oc,bcn->bon", wk, x_flat) + bk[None]).astype(jnp.bfloat16)
    v_all = (jnp.einsum("oc,bcn->bon", params["wv"], x_flat)
             + params["bv"][None]).astype(jnp.bfloat16)

    resident = lambda shape: pl.BlockSpec(shape, lambda b, qi: (b, 0, 0))
    in_specs = [
        pl.BlockSpec((None, Cqp, tq), lambda b, qi: (b, 0, qi)),   # q row tile
        resident((None, Cqp, Np)),                                 # k (all keys)
        resident((None, C, Np)),                                   # v (all values)
        pl.BlockSpec((None, C, tq), lambda b, qi: (b, 0, qi)),     # x tile (residual)
    ]
    args = [q_all, k_all, v_all, x_flat]
    if masked:
        key_mask = jnp.where(jnp.arange(Np) < N, 0.0, -1e30).astype(jnp.float32)
        args.append(key_mask.reshape(1, Np))
        in_specs.append(pl.BlockSpec((1, Np), lambda b, qi: (0, 0)))
        kernel = _attn_kernel_masked
    else:
        kernel = _attn_kernel
    args.append(params["gamma"])
    in_specs.append(pl.BlockSpec(memory_space=pltpu.MemorySpace.SMEM))

    vmem_limit = int(min(max(_vmem_block_bytes(C, Cqp, Np, tq, masked) + (4 << 20),
                             32 << 20),
                         _vmem_cap()))

    out_flat, attn_pad = pl.pallas_call(
        kernel,
        out_shape=(
            jax.ShapeDtypeStruct((B, C, Np), x.dtype),
            # bf16 attention writeback halves the dominant HBM traffic.
            jax.ShapeDtypeStruct((B, Np, Np), jnp.bfloat16),
        ),
        grid_spec=pltpu.PrefetchScalarGridSpec(
            num_scalar_prefetch=0,
            grid=(B, Np // tq),
            in_specs=in_specs,
            out_specs=[
                pl.BlockSpec((None, C, tq), lambda b, qi: (b, 0, qi)),   # out cols
                pl.BlockSpec((None, tq, Np), lambda b, qi: (b, qi, 0)),  # attn rows
            ],
        ),
        compiler_params=pltpu.CompilerParams(
            # No state is carried across qi any more -> both axes parallel
            # (batch across megacore / 2 TCs, query tiles as well).
            dimension_semantics=("parallel", "parallel"),
            vmem_limit_bytes=vmem_limit,
        ),
    )(*args)

    out = out_flat[:, :, :N].reshape(B, C, W, H)
    attn = attn_pad[:, :N, :N].astype(jnp.float32)
    return out, attn


# ----------------------------------------------------------------------------- reference


def reference(x, params):
    """Pure-JAX (f32) reference matching the PyTorch forward."""
    B, C, W, H = x.shape
    N = W * H
    xf = x.reshape(B, C, N)
    q = jnp.einsum("oc,bcn->bon", params["wq"], xf) + params["bq"][None]
    k = jnp.einsum("oc,bcn->bon", params["wk"], xf) + params["bk"][None]
    v = jnp.einsum("oc,bcn->bon", params["wv"], xf) + params["bv"][None]
    scores = jnp.einsum("bcn,bcm->bnm", q, k)                # (B, N, N)
    attn = jax.nn.softmax(scores, axis=-1)
    out = jnp.einsum("bcn,bmn->bcm", v, attn)                # v @ attn^T
    out = params["gamma"][0, 0] * out + xf
    return out.reshape(B, C, W, H), attn


def init_params(key, in_dim, k=8):
    cq = in_dim // k
    ks = jax.random.split(key, 6)
    scale = 1.0 / jnp.sqrt(in_dim)
    return {
        "wq": jax.random.uniform(ks[0], (cq, in_dim), jnp.float32, -scale, scale),
        "bq": jax.random.uniform(ks[1], (cq, 1), jnp.float32, -scale, scale),
        "wk": jax.random.uniform(ks[2], (cq, in_dim), jnp.float32, -scale, scale),
        "bk": jax.random.uniform(ks[3], (cq, 1), jnp.float32, -scale, scale),
        "wv": jax.random.uniform(ks[4], (in_dim, in_dim), jnp.float32, -scale, scale),
        "bv": jax.random.uniform(ks[5], (in_dim, 1), jnp.float32, -scale, scale),
        # gamma is initialized to 0.0 in the PyTorch module.
        "gamma": jnp.zeros((1, 1), jnp.float32),
    }


if __name__ == "__main__":
    key = jax.random.PRNGKey(0)
    kx, kp, kx2 = jax.random.split(key, 3)

    # Primary shape: in_dim=16, k=8 -> query/key channels = 2; N = 256.
    B, C, W, H = 2, 16, 16, 16
    x = jax.random.normal(kx, (B, C, W, H), jnp.float32)
    params = init_params(kp, C, k=8)
    # The module initializes gamma to 0 (out == x); use a nonzero gamma so the
    # attention-output path is actually exercised by the check.
    params["gamma"] = jnp.full((1, 1), 0.5, jnp.float32)

    out, attn = self_attention(x, params)
    out, attn = jax.block_until_ready((out, attn))
    out_ref, attn_ref = reference(x, params)
    assert out.shape == (B, C, W, H) and attn.shape == (B, W * H, W * H)
    # bf16 MXU operands + bf16 attn store + approx reciprocal -> loosened tol.
    assert jnp.allclose(out, out_ref, atol=2e-2, rtol=2e-2)
    assert jnp.allclose(attn, attn_ref, atol=2e-2, rtol=2e-2)

    # Non-multiple-of-128 spatial size exercises the padded / masked key path.
    W2 = H2 = 9
    x2 = jax.random.normal(kx2, (B, C, W2, H2), jnp.float32)
    out2, attn2 = self_attention(x2, params)
    out2, attn2 = jax.block_until_ready((out2, attn2))
    out2_ref, attn2_ref = reference(x2, params)
    assert out2.shape == (B, C, W2, H2) and attn2.shape == (B, W2 * H2, W2 * H2)
    assert jnp.allclose(out2, out2_ref, atol=2e-2, rtol=2e-2)
    assert jnp.allclose(attn2, attn2_ref, atol=2e-2, rtol=2e-2)

    print("KERNEL_OK")
</pallas_src>

<mosaic_0001>
module attributes {stable_mosaic.version = 11 : i64} {
  func.func @_attn_kernel(%arg0: i32, %arg1: i32, %arg2: memref<1x16x128xbf16, #tpu.memory_space<vmem>>, %arg3: memref<1x16x256xbf16, #tpu.memory_space<vmem>>, %arg4: memref<1x16x256xbf16, #tpu.memory_space<vmem>>, %arg5: memref<1x16x128xf32, #tpu.memory_space<vmem>>, %arg6: memref<1x1xf32, #tpu.memory_space<smem>>, %arg7: memref<1x16x128xf32, #tpu.memory_space<vmem>>, %arg8: memref<1x128x256xbf16, #tpu.memory_space<vmem>>) attributes {dimension_semantics = [#tpu.dimension_semantics<parallel>, #tpu.dimension_semantics<parallel>], iteration_bounds = array<i64: 2, 2>, scalar_prefetch = 0 : i64, scratch_operands = 0 : i64, tpu.core_type = #tpu.core_type<tc>, window_params = [{transform_indices = @transform_0, window_bounds = array<i64: 1, 16, 128>}, {transform_indices = @transform_1, window_bounds = array<i64: 1, 16, 256>}, {transform_indices = @transform_2, window_bounds = array<i64: 1, 16, 256>}, {transform_indices = @transform_3, window_bounds = array<i64: 1, 16, 128>}, {transform_indices = @transform_4, window_bounds = array<i64: 1, 1>}, {transform_indices = @transform_5, window_bounds = array<i64: 1, 16, 128>}, {transform_indices = @transform_6, window_bounds = array<i64: 1, 128, 256>}]} {
    %c0 = arith.constant 0 : index
    %c0_0 = arith.constant 0 : index
    %c0_1 = arith.constant 0 : index
    %0 = vector.load %arg2[%c0, %c0_0, %c0_1] : memref<1x16x128xbf16, #tpu.memory_space<vmem>>, vector<1x16x128xbf16>
    %1 = vector.shape_cast %0 : vector<1x16x128xbf16> to vector<16x128xbf16>
    %c0_2 = arith.constant 0 : index
    %c0_3 = arith.constant 0 : index
    %c0_4 = arith.constant 0 : index
    %2 = vector.load %arg3[%c0_2, %c0_3, %c0_4] : memref<1x16x256xbf16, #tpu.memory_space<vmem>>, vector<1x16x256xbf16>
    %3 = vector.shape_cast %2 : vector<1x16x256xbf16> to vector<16x256xbf16>
    %cst = arith.constant dense<0.000000e+00> : vector<128x256xf32>
    %4 = tpu.matmul %1, %3, %cst {dimension_numbers = #tpu.dot_dimension_numbers<[0], [0], [1], [1], [0, 1, 1, 1], [], []>} : vector<16x128xbf16>, vector<16x256xbf16>, vector<128x256xf32> -> vector<128x256xf32>
    %cst_5 = arith.constant dense<0xFF800000> : vector<128xf32>
    %5 = vector.multi_reduction <maximumf>, %4, %cst_5 [1] : vector<128x256xf32> to vector<128xf32>
    %6 = vector.shape_cast %5 : vector<128xf32> to vector<128x1xf32>
    %7 = vector.broadcast %6 : vector<128x1xf32> to vector<128x256xf32>
    %8 = arith.subf %4, %7 : vector<128x256xf32>
    %9 = math.exp %8 : vector<128x256xf32>
    %cst_6 = arith.constant dense<0.000000e+00> : vector<128xf32>
    %10 = vector.multi_reduction <add>, %9, %cst_6 [1] : vector<128x256xf32> to vector<128xf32>
    %11 = vector.shape_cast %10 : vector<128xf32> to vector<128x1xf32>
    %12 = tpu.reciprocal %11 {approx = true} : vector<128x1xf32> -> vector<128x1xf32>
    %13 = vector.broadcast %12 : vector<128x1xf32> to vector<128x256xf32>
    %14 = arith.mulf %9, %13 : vector<128x256xf32>
    %15 = arith.truncf %14 : vector<128x256xf32> to vector<128x256xbf16>
    %c0_7 = arith.constant 0 : index
    %c0_8 = arith.constant 0 : index
    %c0_9 = arith.constant 0 : index
    %16 = vector.load %arg8[%c0_7, %c0_8, %c0_9] : memref<1x128x256xbf16, #tpu.memory_space<vmem>>, vector<1x128x256xbf16>
    %17 = vector.shape_cast %16 : vector<1x128x256xbf16> to vector<128x256xbf16>
    %18 = vector.shape_cast %15 : vector<128x256xbf16> to vector<1x128x256xbf16>
    tpu.vector_store %arg8[%c0_7, %c0_8, %c0_9], %18 {strides = array<i32>} : memref<1x128x256xbf16, #tpu.memory_space<vmem>>, vector<1x128x256xbf16>,
    %c0_10 = arith.constant 0 : index
    %c0_11 = arith.constant 0 : index
    %c0_12 = arith.constant 0 : index
    %19 = vector.load %arg4[%c0_10, %c0_11, %c0_12] : memref<1x16x256xbf16, #tpu.memory_space<vmem>>, vector<1x16x256xbf16>
    %20 = vector.shape_cast %19 : vector<1x16x256xbf16> to vector<16x256xbf16>
    %cst_13 = arith.constant dense<0.000000e+00> : vector<16x128xf32>
    %21 = tpu.matmul %20, %15, %cst_13 {dimension_numbers = #tpu.dot_dimension_numbers<[1], [1], [0], [0], [0, 0, 1, 0], [], []>} : vector<16x256xbf16>, vector<128x256xbf16>, vector<16x128xf32> -> vector<16x128xf32>
    %c0_14 = arith.constant 0 : index
    %c0_15 = arith.constant 0 : index
    %22 = memref.load %arg6[%c0_14, %c0_15] : memref<1x1xf32, #tpu.memory_space<smem>>
    %23 = vector.broadcast %22 : f32 to vector<16x128xf32>
    %24 = arith.mulf %23, %21 : vector<16x128xf32>
    %c0_16 = arith.constant 0 : index
    %c0_17 = arith.constant 0 : index
    %c0_18 = arith.constant 0 : index
    %25 = vector.load %arg5[%c0_16, %c0_17, %c0_18] : memref<1x16x128xf32, #tpu.memory_space<vmem>>, vector<1x16x128xf32>
    %26 = vector.shape_cast %25 : vector<1x16x128xf32> to vector<16x128xf32>
    %27 = arith.addf %24, %26 : vector<16x128xf32>
    %c0_19 = arith.constant 0 : index
    %c0_20 = arith.constant 0 : index
    %c0_21 = arith.constant 0 : index
    %28 = vector.load %arg7[%c0_19, %c0_20, %c0_21] : memref<1x16x128xf32, #tpu.memory_space<vmem>>, vector<1x16x128xf32>
    %29 = vector.shape_cast %28 : vector<1x16x128xf32> to vector<16x128xf32>
    %30 = vector.shape_cast %27 : vector<16x128xf32> to vector<1x16x128xf32>
    tpu.vector_store %arg7[%c0_19, %c0_20, %c0_21], %30 {strides = array<i32>} : memref<1x16x128xf32, #tpu.memory_space<vmem>>, vector<1x16x128xf32>,
    return
  }
  func.func @transform_0(%arg0: i32, %arg1: i32) -> (i32, i32, i32) {
    %c0_i32 = arith.constant 0 : i32
    %c0_i32_0 = arith.constant 0 : i32
    return %arg0, %c0_i32, %arg1 : i32, i32, i32
  }
  func.func @transform_1(%arg0: i32, %arg1: i32) -> (i32, i32, i32) {
    %c0_i32 = arith.constant 0 : i32
    %c0_i32_0 = arith.constant 0 : i32
    %c0_i32_1 = arith.constant 0 : i32
    return %arg0, %c0_i32, %c0_i32_0 : i32, i32, i32
  }
  func.func @transform_2(%arg0: i32, %arg1: i32) -> (i32, i32, i32) {
    %c0_i32 = arith.constant 0 : i32
    %c0_i32_0 = arith.constant 0 : i32
    %c0_i32_1 = arith.constant 0 : i32
    return %arg0, %c0_i32, %c0_i32_0 : i32, i32, i32
  }
  func.func @transform_3(%arg0: i32, %arg1: i32) -> (i32, i32, i32) {
    %c0_i32 = arith.constant 0 : i32
    %c0_i32_0 = arith.constant 0 : i32
    return %arg0, %c0_i32, %arg1 : i32, i32, i32
  }
  func.func @transform_4(%arg0: i32, %arg1: i32) -> (i32, i32) {
    %c0_i32 = arith.constant 0 : i32
    %c0_i32_0 = arith.constant 0 : i32
    %c0_i32_1 = arith.constant 0 : i32
    return %c0_i32, %c0_i32_0 : i32, i32
  }
  func.func @transform_5(%arg0: i32, %arg1: i32) -> (i32, i32, i32) {
    %c0_i32 = arith.constant 0 : i32
    %c0_i32_0 = arith.constant 0 : i32
    return %arg0, %c0_i32, %arg1 : i32, i32, i32
  }
  func.func @transform_6(%arg0: i32, %arg1: i32) -> (i32, i32, i32) {
    %c0_i32 = arith.constant 0 : i32
    %c0_i32_0 = arith.constant 0 : i32
    return %arg0, %arg1, %c0_i32 : i32, i32, i32
  }
}

</mosaic_0001>

<llo_original>
// kernel: tpu_custom_call.1
$region0: #{tpu_custom_call.1}
  #allocation0 [shape = 'u32[]', space=smem, size = 0x4, offset = 0x4, fixed_abs, tag = 'smem constant byte address 0x4 - core index']
  #allocation1 [shape = 'u32[144,128]{1,0:T(1,128)}', space=vmem, size = 0x12000, scoped, tag = 'internal scratch']
  #allocation2 [shape = 'f32[1,1]{1,0:T(1,128)S(6)}', space=smem, size = 0x200, scoped, tag = 'scoped memory for tpu_custom_call.1']
  %s0 = inlined_call_operand.hbm [shape: bf16[2,16,256], index: 0, kind: input, shape index: {}]
  %s1 = inlined_call_operand.hbm [shape: bf16[2,16,256], index: 1, kind: input, shape index: {}]
  %s2 = inlined_call_operand.hbm [shape: bf16[2,16,256], index: 2, kind: input, shape index: {}]
  %s3 = inlined_call_operand.hbm [shape: f32[2,16,256], index: 3, kind: input, shape index: {}]
  %s4 = inlined_call_operand.<no memory space> [shape: f32[1,1], index: 4, kind: input, shape index: {}]
  %s5 = inlined_call_operand.hbm [shape: f32[2,16,256], index: 5, kind: output, shape index: {0}]
  %s6 = inlined_call_operand.hbm [shape: bf16[2,256,256], index: 6, kind: output, shape index: {1}]
  %7 = xla_tuple %s5, %s6
  %s8 = sld [smem:[#allocation0]]
  $region77: #{tpu_custom_call.1} parent=0
    _
  %s10 = ssub.s32 1, %s8
  %s11 = scalar_select 0, %s10, %s8
  %12 = sst [smem:[#allocation2]] %s4
  $region1: #{tpu_custom_call.1} parent=0
    #allocation3 [shape = 'u8[8192]{0}', space=vmem, size = 0x2000, scoped, tag = 'input window, operand 0']
    #allocation4 [shape = 's32[2]{0}', space=sflag, size = 0x8, scoped, tag = 'scoped memory for tpu_custom_call.1']
    #allocation5 [shape = 's32[2]{0}', space=sflag, size = 0x8, scoped, tag = 'scoped memory for tpu_custom_call.1']
    #allocation6 [shape = 'u8[16384]{0}', space=vmem, size = 0x4000, scoped, tag = 'input window, operand 1']
    #allocation7 [shape = 's32[2]{0}', space=sflag, size = 0x8, scoped, tag = 'scoped memory for tpu_custom_call.1']
    #allocation8 [shape = 'u8[16384]{0}', space=vmem, size = 0x4000, scoped, tag = 'input window, operand 2']
    #allocation9 [shape = 'u8[16384]{0}', space=vmem, size = 0x4000, scoped, tag = 'input window, operand 3']
    #allocation10 [shape = 's32[2]{0}', space=sflag, size = 0x8, scoped, tag = 'scoped memory for tpu_custom_call.1']
    #allocation11 [shape = 'u8[16384]{0}', space=vmem, size = 0x4000, scoped, tag = 'output window, operand 0']
    #allocation12 [shape = 'u8[131072]{0}', space=vmem, size = 0x20000, scoped, tag = 'output window, operand 1']
    #allocation13 [shape = 's32[2]{0}', space=sflag, size = 0x8, scoped, tag = 'scoped memory for tpu_custom_call.1']
    %13 = vsyncpa [#allocation4], 0
    %s14 = scalar_lea.sflag [#allocation4], 1
    %15 = vsyncpa %s14, 0
    %16 = vsyncpa [#allocation7], 0
    %s17 = scalar_lea.sflag [#allocation7], 1
    %18 = vsyncpa %s17, 0
    %19 = vsyncpa [#allocation10], 0
    %s20 = scalar_lea.sflag [#allocation10], 1
    %21 = vsyncpa %s20, 0
    %22 = vsyncpa [#allocation5], 0
    %s23 = scalar_lea.sflag [#allocation5], 1
    %24 = vsyncpa %s23, 0
    %25 = vsyncpa [#allocation13], 0
    %s26 = scalar_lea.sflag [#allocation13], 1
    %27 = vsyncpa %s26, 0
    loop: start=0, step=1, limit=6
    $region2: #{tpu_custom_call.1} parent=1 // loop_pre_header
      _
    $region3: #{tpu_custom_call.1} parent=1 // loop_header
      %s29 = sphi 0, %s33
      %p30 = scmp.ge.s32.totalorder %s29, 6
      %s36 = sphi 0, %s48
      %s37 = sphi 0, %s44
      %s38 = sphi 0, %s36
      %s39 = sphi 0, %s37
      %s40 = sphi 0, %s38
      %s41 = sphi 0, %s39
      %s53 = sphi 0, %s55
      %s56 = sphi 0, %s53
      %s57 = sphi 0, %s56
      %s73 = sphi 0, %s57
      %s79 = sphi 0, %s81
      %s82 = sphi 0, %s79
      %s83 = sphi 0, %s82
      %s99 = sphi 0, %s83
      %s105 = sphi 0, %s107
      %s108 = sphi 0, %s105
      %s109 = sphi 0, %s108
      %s125 = sphi 0, %s109
      %s133 = sphi 0, %s135
      %s136 = sphi 0, %s133
      %s137 = sphi 0, %s136
      %s153 = sphi 0, %s137
      %s157 = sphi 0, %s157
      %s159 = sphi 0, %s157
      %s160 = sphi 0, %s159
      %s174 = sphi 0, %s160
      %s182 = sphi 0, %s184
      %s185 = sphi 0, %s182
      %s186 = sphi 0, %s185
      %s202 = sphi 0, %s186
      %s210 = sphi 0, %s212
      %s213 = sphi 0, %s210
      %s214 = sphi 0, %s213
      %s230 = sphi 0, %s214
    $region4: #{tpu_custom_call.1} parent=1 // loop_header_branch
      %32 = sbr.rel (%p30) target = $region8
    $region5: #{tpu_custom_call.1} parent=1 // loop_body
      %s34 = ssub.s32 %s29, 1
      %s35 = ssub.s32 %s29, 2
      %s42 = sadd.s32 1, %s37
      %p43 = scmp.ge.s32.totalorder %s42, 2
      %s44 = scalar_select %p43, 0, %s42
      %s45 = sadd.s32 1, %s36
      %s46 = scalar_select %p43, %s45, %s36
      %p47 = scmp.ge.s32.totalorder %s46, 2
      %s48 = scalar_select %p47, 0, %s46
      %s49 = ssub.s32 %s36, %s48
      %s50 = ssub.s32 %s37, %s44
      %s51 = sor.u32 %s49, %s50
      %p52 = scmp.eq.s32.totalorder %s51, 0
      %s54 = sadd.s32 %s53, 1
      %s55 = scalar_select %p52, %s53, %s54
      %p58 = pneg %p52
      %p59 = scmp.eq.s32.totalorder %s29, 3
      %p60 = por %p58, %p59
      %p61 = scmp.ne.s32.totalorder %s53, %s56
      %p62 = scmp.eq.s32.totalorder %s29, 0
      %p63 = por %p61, %p62
      %p64 = scmp.ne.s32.totalorder %s53, %s56
      %p65 = scmp.eq.s32.totalorder %s34, 3
      %p66 = por %p64, %p65
      %p67 = scmp.ne.s32.totalorder %s56, %s57
      %p68 = scmp.eq.s32.totalorder %s34, 0
      %p69 = por %p67, %p68
      %p70 = scmp.ne.s32.totalorder %s56, %s57
      %p71 = scmp.eq.s32.totalorder %s35, 3
      %p72 = por %p70, %p71
      %p74 = scmp.ne.s32.totalorder %s57, %s73
      %p75 = scmp.eq.s32.totalorder %s35, 0
      %p76 = por %p74, %p75
      %s77 = ssub.s32 %s36, %s48
      %p78 = scmp.eq.s32.totalorder %s77, 0
      %s80 = sadd.s32 %s79, 1
      %s81 = scalar_select %p78, %s79, %s80
      %p84 = pneg %p78
      %p85 = scmp.eq.s32.totalorder %s29, 3
      %p86 = por %p84, %p85
      %p87 = scmp.ne.s32.totalorder %s79, %s82
      %p88 = scmp.eq.s32.totalorder %s29, 0
      %p89 = por %p87, %p88
      %p90 = scmp.ne.s32.totalorder %s79, %s82
      %p91 = scmp.eq.s32.totalorder %s34, 3
      %p92 = por %p90, %p91
      %p93 = scmp.ne.s32.totalorder %s82, %s83
      %p94 = scmp.eq.s32.totalorder %s34, 0
      %p95 = por %p93, %p94
      %p96 = scmp.ne.s32.totalorder %s82, %s83
      %p97 = scmp.eq.s32.totalorder %s35, 3
      %p98 = por %p96, %p97
      %p100 = scmp.ne.s32.totalorder %s83, %s99
      %p101 = scmp.eq.s32.totalorder %s35, 0
      %p102 = por %p100, %p101
      %s103 = ssub.s32 %s36, %s48
      %p104 = scmp.eq.s32.totalorder %s103, 0
      %s106 = sadd.s32 %s105, 1
      %s107 = scalar_select %p104, %s105, %s106
      %p110 = pneg %p104
      %p111 = scmp.eq.s32.totalorder %s29, 3
      %p112 = por %p110, %p111
      %p113 = scmp.ne.s32.totalorder %s105, %s108
      %p114 = scmp.eq.s32.totalorder %s29, 0
      %p115 = por %p113, %p114
      %p116 = scmp.ne.s32.totalorder %s105, %s108
      %p117 = scmp.eq.s32.totalorder %s34, 3
      %p118 = por %p116, %p117
      %p119 = scmp.ne.s32.totalorder %s108, %s109
      %p120 = scmp.eq.s32.totalorder %s34, 0
      %p121 = por %p119, %p120
      %p122 = scmp.ne.s32.totalorder %s108, %s109
      %p123 = scmp.eq.s32.totalorder %s35, 3
      %p124 = por %p122, %p123
      %p126 = scmp.ne.s32.totalorder %s109, %s125
      %p127 = scmp.eq.s32.totalorder %s35, 0
      %p128 = por %p126, %p127
      %s129 = ssub.s32 %s36, %s48
      %s130 = ssub.s32 %s37, %s44
      %s131 = sor.u32 %s129, %s130
      %p132 = scmp.eq.s32.totalorder %s131, 0
      %s134 = sadd.s32 %s133, 1
      %s135 = scalar_select %p132, %s133, %s134
      %p138 = pneg %p132
      %p139 = scmp.eq.s32.totalorder %s29, 3
      %p140 = por %p138, %p139
      %p141 = scmp.ne.s32.totalorder %s133, %s136
      %p142 = scmp.eq.s32.totalorder %s29, 0
      %p143 = por %p141, %p142
      %p144 = scmp.ne.s32.totalorder %s133, %s136
      %p145 = scmp.eq.s32.totalorder %s34, 3
      %p146 = por %p144, %p145
      %p147 = scmp.ne.s32.totalorder %s136, %s137
      %p148 = scmp.eq.s32.totalorder %s34, 0
      %p149 = por %p147, %p148
      %p150 = scmp.ne.s32.totalorder %s136, %s137
      %p151 = scmp.eq.s32.totalorder %s35, 3
      %p152 = por %p150, %p151
      %p154 = scmp.ne.s32.totalorder %s137, %s153
      %p155 = scmp.eq.s32.totalorder %s35, 0
      %p156 = por %p154, %p155
      %s158 = sadd.s32 %s157, 1
      %p161 = scmp.eq.s32.totalorder %s29, 3
      %p162 = scmp.ne.s32.totalorder %s157, %s159
      %p163 = scmp.eq.s32.totalorder %s29, 0
      %p164 = por %p162, %p163
      %p165 = scmp.ne.s32.totalorder %s157, %s159
      %p166 = scmp.eq.s32.totalorder %s34, 3
      %p167 = por %p165, %p166
      %p168 = scmp.ne.s32.totalorder %s159, %s160
      %p169 = scmp.eq.s32.totalorder %s34, 0
      %p170 = por %p168, %p169
      %p171 = scmp.ne.s32.totalorder %s159, %s160
      %p172 = scmp.eq.s32.totalorder %s35, 3
      %p173 = por %p171, %p172
      %p175 = scmp.ne.s32.totalorder %s160, %s174
      %p176 = scmp.eq.s32.totalorder %s35, 0
      %p177 = por %p175, %p176
      %s178 = ssub.s32 %s36, %s48
      %s179 = ssub.s32 %s37, %s44
      %s180 = sor.u32 %s178, %s179
      %p181 = scmp.eq.s32.totalorder %s180, 0
      %s183 = sadd.s32 %s182, 1
      %s184 = scalar_select %p181, %s182, %s183
      %p187 = pneg %p181
      %p188 = scmp.eq.s32.totalorder %s29, 3
      %p189 = por %p187, %p188
      %p190 = scmp.ne.s32.totalorder %s182, %s185
      %p191 = scmp.eq.s32.totalorder %s29, 0
      %p192 = por %p190, %p191
      %p193 = scmp.ne.s32.totalorder %s182, %s185
      %p194 = scmp.eq.s32.totalorder %s34, 3
      %p195 = por %p193, %p194
      %p196 = scmp.ne.s32.totalorder %s185, %s186
      %p197 = scmp.eq.s32.totalorder %s34, 0
      %p198 = por %p196, %p197
      %p199 = scmp.ne.s32.totalorder %s185, %s186
      %p200 = scmp.eq.s32.totalorder %s35, 3
      %p201 = por %p199, %p200
      %p203 = scmp.ne.s32.totalorder %s186, %s202
      %p204 = scmp.eq.s32.totalorder %s35, 0
      %p205 = por %p203, %p204
      %s206 = ssub.s32 %s36, %s48
      %s207 = ssub.s32 %s37, %s44
      %s208 = sor.u32 %s206, %s207
      %p209 = scmp.eq.s32.totalorder %s208, 0
      %s211 = sadd.s32 %s210, 1
      %s212 = scalar_select %p209, %s210, %s211
      %p215 = pneg %p209
      %p216 = scmp.eq.s32.totalorder %s29, 3
      %p217 = por %p215, %p216
      %p218 = scmp.ne.s32.totalorder %s210, %s213
      %p219 = scmp.eq.s32.totalorder %s29, 0
      %p220 = por %p218, %p219
      %p221 = scmp.ne.s32.totalorder %s210, %s213
      %p222 = scmp.eq.s32.totalorder %s34, 3
      %p223 = por %p221, %p222
      %p224 = scmp.ne.s32.totalorder %s213, %s214
      %p225 = scmp.eq.s32.totalorder %s34, 0
      %p226 = por %p224, %p225
      %p227 = scmp.ne.s32.totalorder %s213, %s214
      %p228 = scmp.eq.s32.totalorder %s35, 3
      %p229 = por %p227, %p228
      %p231 = scmp.ne.s32.totalorder %s214, %s230
      %p232 = scmp.eq.s32.totalorder %s35, 0
      %p233 = por %p231, %p232
      %p234 = scmp.le.s32.totalorder 1, %s29
      %p235 = scmp.lt.s32.totalorder %s29, 5
      %p236 = pnand %p234, %p235
      %p237 = pneg %p236
      // Predicated region
      $region9: #{tpu_custom_call.1} parent=5 // pred_check
        _
      $region10: #{tpu_custom_call.1} parent=5 // pred_check_branch
        %239 = sbr.rel (%p236) target = $region12
      $region11: #{tpu_custom_call.1} parent=5 // pred_region
        %s240 = ssub.s32 %s29, 1
        // Predicated region
        $region13: #{tpu_custom_call.1} parent=11 // pred_check
          %p241 = pneg %p170
        $region14: #{tpu_custom_call.1} parent=11 // pred_check_branch
          %243 = sbr.rel (%p241) target = $region16
        $region15: #{tpu_custom_call.1} parent=11 // pred_region
          _
        $region16: #{tpu_custom_call.1} parent=11 // pred_fallthru
          _
      $region12: #{tpu_custom_call.1} parent=5 // pred_fallthru
        _
      %p244 = scmp.lt.s32.totalorder %s29, 4
      // Predicated region
      $region17: #{tpu_custom_call.1} parent=5 // pred_check
        %p245 = pneg %p244
      $region18: #{tpu_custom_call.1} parent=5 // pred_check_branch
        %247 = sbr.rel (%p245) target = $region20
      $region19: #{tpu_custom_call.1} parent=5 // pred_region
        // Predicated region
        $region21: #{tpu_custom_call.1} parent=19 // pred_check
          %p248 = pneg %p63
        $region22: #{tpu_custom_call.1} parent=19 // pred_check_branch
          %250 = sbr.rel (%p248) target = $region24
        $region23: #{tpu_custom_call.1} parent=19 // pred_region
          %s251 = sand.u32 %s53, 1
          %s252 = scalar_lea.sflag [#allocation4], %s251
          %s253 = sand.u32 %s53, 1
          %s254 = smul.addr %s253, 8
          %s255 = scalar_lea.vmem [#allocation3], %s254
          %s257 = ssub.s32 128, 128
          %258 = vsyncadd %s252, %s257
          %s259 = smul.addr %s36, 4
          %s260 = sadd.s32 %s37, %s259
          %s261 = smul.addr %s260, 64
          %s262 = scalar_lea.hbm %s0, %s261
          %s263 = sshll.u32 %s255, 4
          %s264 = int_to_ptr.vmem [resolvable:$true] %s263
          %269 = dma.hbm_to_vmem [thread:$0]  %s262, 128, %s264, %s252, 128, 64, 4
        $region24: #{tpu_custom_call.1} parent=19 // pred_fallthru
          _
        // Predicated region
        $region25: #{tpu_custom_call.1} parent=19 // pred_check
          %p270 = pneg %p89
        $region26: #{tpu_custom_call.1} parent=19 // pred_check_branch
          %272 = sbr.rel (%p270) target = $region28
        $region27: #{tpu_custom_call.1} parent=19 // pred_region
          %s273 = sand.u32 %s29, 1
          %s274 = scalar_lea.sflag [#allocation7], %s273
          %s275 = sand.u32 %s79, 1
          %s276 = smul.addr %s275, 16
          %s277 = scalar_lea.vmem [#allocation6], %s276
          %s279 = ssub.s32 256, 256
          %280 = vsyncadd %s274, %s279
          %s281 = smul.addr %s36, 4
          %s282 = smul.addr %s281, 64
          %s283 = scalar_lea.hbm %s1, %s282
          %s284 = sshll.u32 %s277, 4
          %s285 = int_to_ptr.vmem [resolvable:$true] %s284
          %290 = dma.hbm_to_vmem [thread:$0]  %s283, 256, %s285, %s274, 128, 128, 8
        $region28: #{tpu_custom_call.1} parent=19 // pred_fallthru
          _
        // Predicated region
        $region29: #{tpu_custom_call.1} parent=19 // pred_check
          %p291 = pneg %p115
        $region30: #{tpu_custom_call.1} parent=19 // pred_check_branch
          %293 = sbr.rel (%p291) target = $region32
        $region31: #{tpu_custom_call.1} parent=19 // pred_region
          %s294 = sand.u32 %s29, 1
          %s295 = scalar_lea.sflag [#allocation7], %s294
          %s296 = sand.u32 %s105, 1
          %s297 = smul.addr %s296, 16
          %s298 = scalar_lea.vmem [#allocation8], %s297
          %s300 = ssub.s32 256, 256
          %301 = vsyncadd %s295, %s300
          %s302 = smul.addr %s36, 4
          %s303 = smul.addr %s302, 64
          %s304 = scalar_lea.hbm %s2, %s303
          %s305 = sshll.u32 %s298, 4
          %s306 = int_to_ptr.vmem [resolvable:$true] %s305
          %311 = dma.hbm_to_vmem [thread:$0]  %s304, 256, %s306, %s295, 128, 128, 8
        $region32: #{tpu_custom_call.1} parent=19 // pred_fallthru
          _
        // Predicated region
        $region33: #{tpu_custom_call.1} parent=19 // pred_check
          %p312 = pneg %p143
        $region34: #{tpu_custom_call.1} parent=19 // pred_check_branch
          %314 = sbr.rel (%p312) target = $region36
        $region35: #{tpu_custom_call.1} parent=19 // pred_region
          %s315 = sand.u32 %s133, 1
          %s316 = scalar_lea.sflag [#allocation10], %s315
          %s317 = sand.u32 %s133, 1
          %s318 = smul.addr %s317, 16
          %s319 = scalar_lea.vmem [#allocation9], %s318
          %s321 = ssub.s32 256, 256
          %322 = vsyncadd %s316, %s321
          %s323 = smul.addr %s36, 4
          %s324 = sadd.s32 %s37, %s323
          %s325 = smul.addr %s324, 128
          %s326 = scalar_lea.hbm %s3, %s325
          %s327 = sshll.u32 %s319, 4
          %s328 = int_to_ptr.vmem [resolvable:$true] %s327
          %333 = dma.hbm_to_vmem [thread:$0]  %s326, 256, %s328, %s316, 256, 128, 8
        $region36: #{tpu_custom_call.1} parent=19 // pred_fallthru
          _
      $region20: #{tpu_custom_call.1} parent=5 // pred_fallthru
        _
      %p334 = scmp.le.s32.totalorder 1, %s29
      %p335 = scmp.lt.s32.totalorder %s29, 5
      %p336 = pnand %p334, %p335
      %p337 = pneg %p336
      // Predicated region
      $region37: #{tpu_custom_call.1} parent=5 // pred_check
        _
      $region38: #{tpu_custom_call.1} parent=5 // pred_check_branch
        %339 = sbr.rel (%p336) target = $region40
      $region39: #{tpu_custom_call.1} parent=5 // pred_region
        %s340 = ssub.s32 %s29, 1
        %s341 = sand.u32 %s56, 1
        %s342 = scalar_lea.sflag [#allocation4], %s341
        %s343 = sand.u32 %s56, 1
        %s344 = smul.addr %s343, 8
        %s345 = scalar_lea.vmem [#allocation3], %s344
        // Predicated region
        $region41: #{tpu_custom_call.1} parent=39 // pred_check
          %p346 = pneg %p69
        $region42: #{tpu_custom_call.1} parent=39 // pred_check_branch
          %348 = sbr.rel (%p346) target = $region44
        $region43: #{tpu_custom_call.1} parent=39 // pred_region
          %349 = dma.done %s342, 128
        $region44: #{tpu_custom_call.1} parent=39 // pred_fallthru
          _
        %s350 = sand.u32 %s34, 1
        %s351 = scalar_lea.sflag [#allocation7], %s350
        %s352 = sand.u32 %s82, 1
        %s353 = smul.addr %s352, 16
        %s354 = scalar_lea.vmem [#allocation6], %s353
        // Predicated region
        $region45: #{tpu_custom_call.1} parent=39 // pred_check
          %p355 = pneg %p95
        $region46: #{tpu_custom_call.1} parent=39 // pred_check_branch
          %357 = sbr.rel (%p355) target = $region48
        $region47: #{tpu_custom_call.1} parent=39 // pred_region
          %358 = dma.done %s351, 256
        $region48: #{tpu_custom_call.1} parent=39 // pred_fallthru
          _
        %s359 = sand.u32 %s34, 1
        %s360 = scalar_lea.sflag [#allocation7], %s359
        %s361 = sand.u32 %s108, 1
        %s362 = smul.addr %s361, 16
        %s363 = scalar_lea.vmem [#allocation8], %s362
        // Predicated region
        $region49: #{tpu_custom_call.1} parent=39 // pred_check
          %p364 = pneg %p121
        $region50: #{tpu_custom_call.1} parent=39 // pred_check_branch
          %366 = sbr.rel (%p364) target = $region52
        $region51: #{tpu_custom_call.1} parent=39 // pred_region
          %367 = dma.done %s360, 256
        $region52: #{tpu_custom_call.1} parent=39 // pred_fallthru
          _
        %s368 = sand.u32 %s136, 1
        %s369 = scalar_lea.sflag [#allocation10], %s368
        %s370 = sand.u32 %s136, 1
        %s371 = smul.addr %s370, 16
        %s372 = scalar_lea.vmem [#allocation9], %s371
        // Predicated region
        $region53: #{tpu_custom_call.1} parent=39 // pred_check
          %p373 = pneg %p149
        $region54: #{tpu_custom_call.1} parent=39 // pred_check_branch
          %375 = sbr.rel (%p373) target = $region56
        $region55: #{tpu_custom_call.1} parent=39 // pred_region
          %376 = dma.done %s369, 256
        $region56: #{tpu_custom_call.1} parent=39 // pred_fallthru
          _
        %s377 = sand.u32 %s56, 1
        %s378 = scalar_lea.sflag [#allocation4], %s377
        %s379 = sand.u32 %s56, 1
        %s380 = smul.addr %s379, 8
        %s381 = scalar_lea.vmem [#allocation3], %s380
        %p382 = pneg %p69
        %p383 = pneg %p66
        %s384 = sand.u32 %s34, 1
        %s385 = scalar_lea.sflag [#allocation7], %s384
        %s386 = sand.u32 %s82, 1
        %s387 = smul.addr %s386, 16
        %s388 = scalar_lea.vmem [#allocation6], %s387
        %p389 = pneg %p95
        %p390 = pneg %p92
        %s391 = sand.u32 %s34, 1
        %s392 = scalar_lea.sflag [#allocation7], %s391
        %s393 = sand.u32 %s108, 1
        %s394 = smul.addr %s393, 16
        %s395 = scalar_lea.vmem [#allocation8], %s394
        %p396 = pneg %p121
        %p397 = pneg %p118
        %s398 = sand.u32 %s136, 1
        %s399 = scalar_lea.sflag [#allocation10], %s398
        %s400 = sand.u32 %s136, 1
        %s401 = smul.addr %s400, 16
        %s402 = scalar_lea.vmem [#allocation9], %s401
        %p403 = pneg %p149
        %p404 = pneg %p146
        %p405 = pneg %p170
        %p406 = pneg %p167
        %p407 = pneg %p198
        %p408 = pneg %p195
        %s409 = sand.u32 %s185, 1
        %s410 = scalar_lea.sflag [#allocation5], %s409
        %s411 = sand.u32 %s185, 1
        %s412 = smul.addr %s411, 16
        %s413 = scalar_lea.vmem [#allocation11], %s412
        %p414 = pneg %p226
        %p415 = pneg %p223
        %s416 = sand.u32 %s213, 1
        %s417 = scalar_lea.sflag [#allocation13], %s416
        %s418 = sand.u32 %s213, 1
        %s419 = smul.addr %s418, 128
        %s420 = scalar_lea.vmem [#allocation12], %s419
        %s421 = smul.u32 16, %s39
        %v423 = vld [vmem:[%s345] sm:$0xf]
        %v424 = vld [vmem:[%s345 + $0x4] sm:$0xf]
        %v425 = vld [vmem:[%s354] sm:$0xff]
        %v426 = vld [vmem:[%s354 + $0x8] sm:$0xff]
        %v429 = vunpack.c.l.b16 %v423
        %v430 = vunpack.c.l.b16 %v424
        %v431 = vpack.c.b16 %v430, %v429
        %433 = vxpose.xlu0.c.b16.start [1/8] %v431, 128
        %434 = vxpose.xlu0.c.b16.cont [2/8] 0, 128
        %435 = vxpose.xlu0.c.b16.cont [3/8] 0, 128
        %436 = vxpose.xlu0.c.b16.cont [4/8] 0, 128
        %437 = vxpose.xlu0.c.b16.cont [5/8] 0, 128
        %438 = vxpose.xlu0.c.b16.cont [6/8] 0, 128
        %439 = vxpose.xlu0.c.b16.cont [7/8] 0, 128
        %440 = vxpose.xlu0.c.b16.end [8/8] 0, 128
        %v441 = vpop.trf.xlu0
        %v442 = vpop.trf.xlu0
        %v443 = vpop.trf.xlu0
        %v444 = vpop.trf.xlu0
        %v445 = vpop.trf.xlu0
        %v446 = vpop.trf.xlu0
        %v447 = vpop.trf.xlu0
        %v448 = vpop.trf.xlu0
        %v451 = vunpack.c.l.b16 %v425
        %v452 = vunpack.c.h.b16 %v425
        %v453 = vunpack.c.l.b16 %v426
        %v454 = vunpack.c.h.b16 %v426
        %v455 = vpack.c.b16 %v453, %v451
        %v456 = vpack.c.b16 %v454, %v452
        %vm459 = vcmask 130048
        %v461 = vsel %vm459, %v441, 0
        %v464 = vsel %vm459, %v442, 0
        %v467 = vsel %vm459, %v443, 0
        %v470 = vsel %vm459, %v444, 0
        %v473 = vsel %vm459, %v445, 0
        %v476 = vsel %vm459, %v446, 0
        %v479 = vsel %vm459, %v447, 0
        %v482 = vsel %vm459, %v448, 0
        %484 = vmatprep.subr.bf16.mxu0 %v456
        %485 = vmatpush1.bf16.msra.mxu0 %v455
        %486 = vmatprep.subr.bf16.mxu0 0
        %487 = vmatpush1.bf16.msra.mxu0 0
        %488 = vmatprep.subr.bf16.mxu0 0
        %489 = vmatpush1.bf16.msra.mxu0 0
        %490 = vmatprep.subr.bf16.mxu0 0
        %491 = vmatpush1.bf16.msra.mxu0 0
        %492 = vmatprep.subr.bf16.mxu0 0
        %493 = vmatpush1.bf16.msra.mxu0 0
        %494 = vmatprep.subr.bf16.mxu0 0
        %495 = vmatpush1.bf16.msra.mxu0 0
        %496 = vmatprep.subr.bf16.mxu0 0
        %497 = vmatpush1.bf16.msra.mxu0 0
        %498 = vmatprep.subr.bf16.mxu0 0
        %499 = vmatpush1.bf16.msra.mxu0 0
        %500 = vmatprep.subr.bf16.mxu0 0
        %501 = vmatpush1.bf16.msra.mxu0 0
        %502 = vmatprep.subr.bf16.mxu0 0
        %503 = vmatpush1.bf16.msra.mxu0 0
        %504 = vmatprep.subr.bf16.mxu0 0
        %505 = vmatpush1.bf16.msra.mxu0 0
        %506 = vmatprep.subr.bf16.mxu0 0
        %507 = vmatpush1.bf16.msra.mxu0 0
        %508 = vmatprep.subr.bf16.mxu0 0
        %509 = vmatpush1.bf16.msra.mxu0 0
        %510 = vmatprep.subr.bf16.mxu0 0
        %511 = vmatpush1.bf16.msra.mxu0 0
        %512 = vmatprep.subr.bf16.mxu0 0
        %513 = vmatpush1.bf16.msra.mxu0 0
        %514 = vmatprep.subr.bf16.mxu0 0
        %515 = vmatpush1.bf16.msra.mxu0 0
        %516 = vmatprep.mubr.bf16.mxu0 0
        %517 = vmatmul.mubr.bf16.gmra.mrb[0].mxu0 %v461
        %v518 = vpop.f32.mrb[0].mxu0
        %v519 = vadd.f32 0.0, %v518
        %v520 = vpop.f32.mrb[0].mxu0
        %v521 = vadd.f32 0.0, %v520
        %v522 = vpop.f32.mrb[0].mxu0
        %v523 = vadd.f32 0.0, %v522
        %v524 = vpop.f32.mrb[0].mxu0
        %v525 = vadd.f32 0.0, %v524
        %526 = vmatprep.mubr.bf16.mxu0 0
        %527 = vmatmul.mubr.bf16.gmra.mrb[0].mxu0 %v464
        %v528 = vpop.f32.mrb[0].mxu0
        %v529 = vadd.f32 0.0, %v528
        %v530 = vpop.f32.mrb[0].mxu0
        %v531 = vadd.f32 0.0, %v530
        %v532 = vpop.f32.mrb[0].mxu0
        %v533 = vadd.f32 0.0, %v532
        %v534 = vpop.f32.mrb[0].mxu0
        %v535 = vadd.f32 0.0, %v534
        %536 = vmatprep.mubr.bf16.mxu0 0
        %537 = vmatmul.mubr.bf16.gmra.mrb[0].mxu0 %v467
        %v538 = vpop.f32.mrb[0].mxu0
        %v539 = vadd.f32 0.0, %v538
        %v540 = vpop.f32.mrb[0].mxu0
        %v541 = vadd.f32 0.0, %v540
        %v542 = vpop.f32.mrb[0].mxu0
        %v543 = vadd.f32 0.0, %v542
        %v544 = vpop.f32.mrb[0].mxu0
        %v545 = vadd.f32 0.0, %v544
        %546 = vmatprep.mubr.bf16.mxu0 0
        %547 = vmatmul.mubr.bf16.gmra.mrb[0].mxu0 %v470
        %v548 = vpop.f32.mrb[0].mxu0
        %v549 = vadd.f32 0.0, %v548
        %v550 = vpop.f32.mrb[0].mxu0
        %v551 = vadd.f32 0.0, %v550
        %v552 = vpop.f32.mrb[0].mxu0
        %v553 = vadd.f32 0.0, %v552
        %v554 = vpop.f32.mrb[0].mxu0
        %v555 = vadd.f32 0.0, %v554
        %556 = vmatprep.mubr.bf16.mxu0 0
        %557 = vmatmul.mubr.bf16.gmra.mrb[0].mxu0 %v473
        %v558 = vpop.f32.mrb[0].mxu0
        %v559 = vadd.f32 0.0, %v558
        %v560 = vpop.f32.mrb[0].mxu0
        %v561 = vadd.f32 0.0, %v560
        %v562 = vpop.f32.mrb[0].mxu0
        %v563 = vadd.f32 0.0, %v562
        %v564 = vpop.f32.mrb[0].mxu0
        %v565 = vadd.f32 0.0, %v564
        %566 = vmatprep.mubr.bf16.mxu0 0
        %567 = vmatmul.mubr.bf16.gmra.mrb[0].mxu0 %v476
        %v568 = vpop.f32.mrb[0].mxu0
        %v569 = vadd.f32 0.0, %v568
        %v570 = vpop.f32.mrb[0].mxu0
        %v571 = vadd.f32 0.0, %v570
        %v572 = vpop.f32.mrb[0].mxu0
        %v573 = vadd.f32 0.0, %v572
        %v574 = vpop.f32.mrb[0].mxu0
        %v575 = vadd.f32 0.0, %v574
        %576 = vmatprep.mubr.bf16.mxu0 0
        %577 = vmatmul.mubr.bf16.gmra.mrb[0].mxu0 %v479
        %v578 = vpop.f32.mrb[0].mxu0
        %v579 = vadd.f32 0.0, %v578
        %v580 = vpop.f32.mrb[0].mxu0
        %v581 = vadd.f32 0.0, %v580
        %v582 = vpop.f32.mrb[0].mxu0
        %v583 = vadd.f32 0.0, %v582
        %v584 = vpop.f32.mrb[0].mxu0
        %v585 = vadd.f32 0.0, %v584
        %586 = vmatprep.mubr.bf16.mxu0 0
        %587 = vmatmul.mubr.bf16.gmra.mrb[0].mxu0 %v482
        %v588 = vpop.f32.mrb[0].mxu0
        %v589 = vadd.f32 0.0, %v588
        %v590 = vpop.f32.mrb[0].mxu0
        %v591 = vadd.f32 0.0, %v590
        %v592 = vpop.f32.mrb[0].mxu0
        %v593 = vadd.f32 0.0, %v592
        %v594 = vpop.f32.mrb[0].mxu0
        %v595 = vadd.f32 0.0, %v594
        %596 = vdwg.mxu0
        %v597 = vmax.f32 %v519, %v521
        %598 = vmax.xlane.f32.xlu0 %v597
        %v599 = vpop.xlane.xlu0 %598
        %v600 = vmax.f32 %v523, %v525
        %601 = vmax.xlane.f32.xlu0 %v600
        %v602 = vpop.xlane.xlu0 %601
        %v603 = vmax.f32 %v529, %v531
        %604 = vmax.xlane.f32.xlu0 %v603
        %v605 = vpop.xlane.xlu0 %604
        %v606 = vmax.f32 %v533, %v535
        %607 = vmax.xlane.f32.xlu0 %v606
        %v608 = vpop.xlane.xlu0 %607
        %v609 = vmax.f32 %v539, %v541
        %610 = vmax.xlane.f32.xlu0 %v609
        %v611 = vpop.xlane.xlu0 %610
        %v612 = vmax.f32 %v543, %v545
        %613 = vmax.xlane.f32.xlu0 %v612
        %v614 = vpop.xlane.xlu0 %613
        %v615 = vmax.f32 %v549, %v551
        %616 = vmax.xlane.f32.xlu0 %v615
        %v617 = vpop.xlane.xlu0 %616
        %v618 = vmax.f32 %v553, %v555
        %619 = vmax.xlane.f32.xlu0 %v618
        %v620 = vpop.xlane.xlu0 %619
        %v621 = vmax.f32 %v559, %v561
        %622 = vmax.xlane.f32.xlu0 %v621
        %v623 = vpop.xlane.xlu0 %622
        %v624 = vmax.f32 %v563, %v565
        %625 = vmax.xlane.f32.xlu0 %v624
        %v626 = vpop.xlane.xlu0 %625
        %v627 = vmax.f32 %v569, %v571
        %628 = vmax.xlane.f32.xlu0 %v627
        %v629 = vpop.xlane.xlu0 %628
        %v630 = vmax.f32 %v573, %v575
        %631 = vmax.xlane.f32.xlu0 %v630
        %v632 = vpop.xlane.xlu0 %631
        %v633 = vmax.f32 %v579, %v581
        %634 = vmax.xlane.f32.xlu0 %v633
        %v635 = vpop.xlane.xlu0 %634
        %v636 = vmax.f32 %v583, %v585
        %637 = vmax.xlane.f32.xlu0 %v636
        %v638 = vpop.xlane.xlu0 %637
        %v639 = vmax.f32 %v589, %v591
        %640 = vmax.xlane.f32.xlu0 %v639
        %v641 = vpop.xlane.xlu0 %640
        %v642 = vmax.f32 %v593, %v595
        %643 = vmax.xlane.f32.xlu0 %v642
        %v644 = vpop.xlane.xlu0 %643
        %v645 = vsub.f32 %v519, %v599
        %v646 = vsub.f32 %v521, %v599
        %v647 = vsub.f32 %v523, %v602
        %v648 = vsub.f32 %v525, %v602
        %v649 = vsub.f32 %v529, %v605
        %v650 = vsub.f32 %v531, %v605
        %v651 = vsub.f32 %v533, %v608
        %v652 = vsub.f32 %v535, %v608
        %v653 = vsub.f32 %v539, %v611
        %v654 = vsub.f32 %v541, %v611
        %v655 = vsub.f32 %v543, %v614
        %v656 = vsub.f32 %v545, %v614
        %v657 = vsub.f32 %v549, %v617
        %v658 = vsub.f32 %v551, %v617
        %v659 = vsub.f32 %v553, %v620
        %v660 = vsub.f32 %v555, %v620
        %v661 = vsub.f32 %v559, %v623
        %v662 = vsub.f32 %v561, %v623
        %v663 = vsub.f32 %v563, %v626
        %v664 = vsub.f32 %v565, %v626
        %v665 = vsub.f32 %v569, %v629
        %v666 = vsub.f32 %v571, %v629
        %v667 = vsub.f32 %v573, %v632
        %v668 = vsub.f32 %v575, %v632
        %v669 = vsub.f32 %v579, %v635
        %v670 = vsub.f32 %v581, %v635
        %v671 = vsub.f32 %v583, %v638
        %v672 = vsub.f32 %v585, %v638
        %v673 = vsub.f32 %v589, %v641
        %v674 = vsub.f32 %v591, %v641
        %v675 = vsub.f32 %v593, %v644
        %v676 = vsub.f32 %v595, %v644
        %v677 = vmul.f32 %v645, 1.442695
        %v678 = vpow.pop %v677
        %v679 = vmul.f32 %v646, 1.442695
        %v680 = vpow.pop %v679
        %v681 = vmul.f32 %v647, 1.442695
        %v682 = vpow.pop %v681
        %v683 = vmul.f32 %v648, 1.442695
        %v684 = vpow.pop %v683
        %v685 = vmul.f32 %v649, 1.442695
        %v686 = vpow.pop %v685
        %v687 = vmul.f32 %v650, 1.442695
        %v688 = vpow.pop %v687
        %v689 = vmul.f32 %v651, 1.442695
        %v690 = vpow.pop %v689
        %v691 = vmul.f32 %v652, 1.442695
        %v692 = vpow.pop %v691
        %v693 = vmul.f32 %v653, 1.442695
        %v694 = vpow.pop %v693
        %v695 = vmul.f32 %v654, 1.442695
        %v696 = vpow.pop %v695
        %v697 = vmul.f32 %v655, 1.442695
        %v698 = vpow.pop %v697
        %v699 = vmul.f32 %v656, 1.442695
        %v700 = vpow.pop %v699
        %v701 = vmul.f32 %v657, 1.442695
        %v702 = vpow.pop %v701
        %v703 = vmul.f32 %v658, 1.442695
        %v704 = vpow.pop %v703
        %v705 = vmul.f32 %v659, 1.442695
        %v706 = vpow.pop %v705
        %v707 = vmul.f32 %v660, 1.442695
        %v708 = vpow.pop %v707
        %v709 = vmul.f32 %v661, 1.442695
        %v710 = vpow.pop %v709
        %v711 = vmul.f32 %v662, 1.442695
        %v712 = vpow.pop %v711
        %v713 = vmul.f32 %v663, 1.442695
        %v714 = vpow.pop %v713
        %v715 = vmul.f32 %v664, 1.442695
        %v716 = vpow.pop %v715
        %v717 = vmul.f32 %v665, 1.442695
        %v718 = vpow.pop %v717
        %v719 = vmul.f32 %v666, 1.442695
        %v720 = vpow.pop %v719
        %v721 = vmul.f32 %v667, 1.442695
        %v722 = vpow.pop %v721
        %v723 = vmul.f32 %v668, 1.442695
        %v724 = vpow.pop %v723
        %v725 = vmul.f32 %v669, 1.442695
        %v726 = vpow.pop %v725
        %v727 = vmul.f32 %v670, 1.442695
        %v728 = vpow.pop %v727
        %v729 = vmul.f32 %v671, 1.442695
        %v730 = vpow.pop %v729
        %v731 = vmul.f32 %v672, 1.442695
        %v732 = vpow.pop %v731
        %v733 = vmul.f32 %v673, 1.442695
        %v734 = vpow.pop %v733
        %v735 = vmul.f32 %v674, 1.442695
        %v736 = vpow.pop %v735
        %v737 = vmul.f32 %v675, 1.442695
        %v738 = vpow.pop %v737
        %v739 = vmul.f32 %v676, 1.442695
        %v740 = vpow.pop %v739
        %v741 = vadd.f32 %v678, %v680
        %742 = vadd.xlane.f32.xlu0 %v741
        %v743 = vpop.xlane.xlu0 %742
        %v744 = vadd.f32 %v682, %v684
        %745 = vadd.xlane.f32.xlu0 %v744
        %v746 = vpop.xlane.xlu0 %745
        %v747 = vadd.f32 %v686, %v688
        %748 = vadd.xlane.f32.xlu0 %v747
        %v749 = vpop.xlane.xlu0 %748
        %v750 = vadd.f32 %v690, %v692
        %751 = vadd.xlane.f32.xlu0 %v750
        %v752 = vpop.xlane.xlu0 %751
        %v753 = vadd.f32 %v694, %v696
        %754 = vadd.xlane.f32.xlu0 %v753
        %v755 = vpop.xlane.xlu0 %754
        %v756 = vadd.f32 %v698, %v700
        %757 = vadd.xlane.f32.xlu0 %v756
        %v758 = vpop.xlane.xlu0 %757
        %v759 = vadd.f32 %v702, %v704
        %760 = vadd.xlane.f32.xlu0 %v759
        %v761 = vpop.xlane.xlu0 %760
        %v762 = vadd.f32 %v706, %v708
        %763 = vadd.xlane.f32.xlu0 %v762
        %v764 = vpop.xlane.xlu0 %763
        %v765 = vadd.f32 %v710, %v712
        %766 = vadd.xlane.f32.xlu0 %v765
        %v767 = vpop.xlane.xlu0 %766
        %v768 = vadd.f32 %v714, %v716
        %769 = vadd.xlane.f32.xlu0 %v768
        %v770 = vpop.xlane.xlu0 %769
        %v771 = vadd.f32 %v718, %v720
        %772 = vadd.xlane.f32.xlu0 %v771
        %v773 = vpop.xlane.xlu0 %772
        %v774 = vadd.f32 %v722, %v724
        %775 = vadd.xlane.f32.xlu0 %v774
        %v776 = vpop.xlane.xlu0 %775
        %v777 = vadd.f32 %v726, %v728
        %778 = vadd.xlane.f32.xlu0 %v777
        %v779 = vpop.xlane.xlu0 %778
        %v780 = vadd.f32 %v730, %v732
        %781 = vadd.xlane.f32.xlu0 %v780
        %v782 = vpop.xlane.xlu0 %781
        %v783 = vadd.f32 %v734, %v736
        %784 = vadd.xlane.f32.xlu0 %v783
        %v785 = vpop.xlane.xlu0 %784
        %v786 = vadd.f32 %v738, %v740
        %787 = vadd.xlane.f32.xlu0 %v786
        %v788 = vpop.xlane.xlu0 %787
        %v789 = vrcp.pop %v743
        %v790 = vrcp.pop %v746
        %v791 = vrcp.pop %v749
        %v792 = vrcp.pop %v752
        %v793 = vrcp.pop %v755
        %v794 = vrcp.pop %v758
        %v795 = vrcp.pop %v761
        %v796 = vrcp.pop %v764
        %v797 = vrcp.pop %v767
        %v798 = vrcp.pop %v770
        %v799 = vrcp.pop %v773
        %v800 = vrcp.pop %v776
        %v801 = vrcp.pop %v779
        %v802 = vrcp.pop %v782
        %v803 = vrcp.pop %v785
        %v804 = vrcp.pop %v788
        %v805 = vmul.f32 %v678, %v789
        %v806 = vmul.f32 %v680, %v789
        %v807 = vmul.f32 %v682, %v790
        %v808 = vmul.f32 %v684, %v790
        %v809 = vmul.f32 %v686, %v791
        %v810 = vmul.f32 %v688, %v791
        %v811 = vmul.f32 %v690, %v792
        %v812 = vmul.f32 %v692, %v792
        %v813 = vmul.f32 %v694, %v793
        %v814 = vmul.f32 %v696, %v793
        %v815 = vmul.f32 %v698, %v794
        %v816 = vmul.f32 %v700, %v794
        %v817 = vmul.f32 %v702, %v795
        %v818 = vmul.f32 %v704, %v795
        %v819 = vmul.f32 %v706, %v796
        %v820 = vmul.f32 %v708, %v796
        %v821 = vmul.f32 %v710, %v797
        %v822 = vmul.f32 %v712, %v797
        %v823 = vmul.f32 %v714, %v798
        %v824 = vmul.f32 %v716, %v798
        %v825 = vmul.f32 %v718, %v799
        %v826 = vmul.f32 %v720, %v799
        %v827 = vmul.f32 %v722, %v800
        %v828 = vmul.f32 %v724, %v800
        %v829 = vmul.f32 %v726, %v801
        %v830 = vmul.f32 %v728, %v801
        %v831 = vmul.f32 %v730, %v802
        %v832 = vmul.f32 %v732, %v802
        %v833 = vmul.f32 %v734, %v803
        %v834 = vmul.f32 %v736, %v803
        %v835 = vmul.f32 %v738, %v804
        %v836 = vmul.f32 %v740, %v804
        %v837 = vpack.c.bf16 %v807, %v805
        %v838 = vpack.c.bf16 %v808, %v806
        %v839 = vpack.c.bf16 %v811, %v809
        %v840 = vpack.c.bf16 %v812, %v810
        %v841 = vpack.c.bf16 %v815, %v813
        %v842 = vpack.c.bf16 %v816, %v814
        %v843 = vpack.c.bf16 %v819, %v817
        %v844 = vpack.c.bf16 %v820, %v818
        %v845 = vpack.c.bf16 %v823, %v821
        %v846 = vpack.c.bf16 %v824, %v822
        %v847 = vpack.c.bf16 %v827, %v825
        %v848 = vpack.c.bf16 %v828, %v826
        %v849 = vpack.c.bf16 %v831, %v829
        %v850 = vpack.c.bf16 %v832, %v830
        %v851 = vpack.c.bf16 %v835, %v833
        %v852 = vpack.c.bf16 %v836, %v834
        %v869 = vunpack.c.l.b16 %v837
        %v870 = vunpack.c.l.b16 %v838
        %v871 = vunpack.c.h.b16 %v837
        %v872 = vunpack.c.h.b16 %v838
        %v873 = vunpack.c.l.b16 %v839
        %v874 = vunpack.c.l.b16 %v840
        %v875 = vunpack.c.h.b16 %v839
        %v876 = vunpack.c.h.b16 %v840
        %v877 = vunpack.c.l.b16 %v841
        %v878 = vunpack.c.l.b16 %v842
        %v879 = vunpack.c.h.b16 %v841
        %v880 = vunpack.c.h.b16 %v842
        %v881 = vunpack.c.l.b16 %v843
        %v882 = vunpack.c.l.b16 %v844
        %v883 = vunpack.c.h.b16 %v843
        %v884 = vunpack.c.h.b16 %v844
        %v885 = vunpack.c.l.b16 %v845
        %v886 = vunpack.c.l.b16 %v846
        %v887 = vunpack.c.h.b16 %v845
        %v888 = vunpack.c.h.b16 %v846
        %v889 = vunpack.c.l.b16 %v847
        %v890 = vunpack.c.l.b16 %v848
        %v891 = vunpack.c.h.b16 %v847
        %v892 = vunpack.c.h.b16 %v848
        %v893 = vunpack.c.l.b16 %v849
        %v894 = vunpack.c.l.b16 %v850
        %v895 = vunpack.c.h.b16 %v849
        %v896 = vunpack.c.h.b16 %v850
        %v897 = vunpack.c.l.b16 %v851
        %v898 = vunpack.c.l.b16 %v852
        %v899 = vunpack.c.h.b16 %v851
        %v900 = vunpack.c.h.b16 %v852
        %v901 = vpack.c.b16 %v870, %v869
        %v902 = vpack.c.b16 %v872, %v871
        %v903 = vpack.c.b16 %v874, %v873
        %v904 = vpack.c.b16 %v876, %v875
        %v905 = vpack.c.b16 %v878, %v877
        %v906 = vpack.c.b16 %v880, %v879
        %v907 = vpack.c.b16 %v882, %v881
        %v908 = vpack.c.b16 %v884, %v883
        %v909 = vpack.c.b16 %v886, %v885
        %v910 = vpack.c.b16 %v888, %v887
        %v911 = vpack.c.b16 %v890, %v889
        %v912 = vpack.c.b16 %v892, %v891
        %v913 = vpack.c.b16 %v894, %v893
        %v914 = vpack.c.b16 %v896, %v895
        %v915 = vpack.c.b16 %v898, %v897
        %v916 = vpack.c.b16 %v900, %v899
        %933 = vst [vmem:[%s420] sm:$0xff] %v901
        %934 = vst [vmem:[%s420 + $0x8] sm:$0xff] %v902
        %935 = vst [vmem:[%s420 + $0x10] sm:$0xff] %v903
        %936 = vst [vmem:[%s420 + $0x18] sm:$0xff] %v904
        %937 = vst [vmem:[%s420 + $0x20] sm:$0xff] %v905
        %938 = vst [vmem:[%s420 + $0x28] sm:$0xff] %v906
        %939 = vst [vmem:[%s420 + $0x30] sm:$0xff] %v907
        %940 = vst [vmem:[%s420 + $0x38] sm:$0xff] %v908
        %941 = vst [vmem:[%s420 + $0x40] sm:$0xff] %v909
        %942 = vst [vmem:[%s420 + $0x48] sm:$0xff] %v910
        %943 = vst [vmem:[%s420 + $0x50] sm:$0xff] %v911
        %944 = vst [vmem:[%s420 + $0x58] sm:$0xff] %v912
        %945 = vst [vmem:[%s420 + $0x60] sm:$0xff] %v913
        %946 = vst [vmem:[%s420 + $0x68] sm:$0xff] %v914
        %947 = vst [vmem:[%s420 + $0x70] sm:$0xff] %v915
        %948 = vst [vmem:[%s420 + $0x78] sm:$0xff] %v916
        %v949 = vld [vmem:[%s363] sm:$0xff]
        %v950 = vld [vmem:[%s363 + $0x8] sm:$0xff]
        %v953 = vunpack.c.l.b16 %v949
        %v954 = vunpack.c.h.b16 %v949
        %v955 = vunpack.c.l.b16 %v950
        %v956 = vunpack.c.h.b16 %v950
        %v957 = vpack.c.b16 %v955, %v953
        %v958 = vpack.c.b16 %v956, %v954
        %961 = vmatprep.subr.bf16.mxu0 %v838
        %962 = vmatpush1.bf16.xpose.msra.mxu0 %v837
        %963 = vmatprep.subr.bf16.mxu0 %v840
        %964 = vmatpush1.bf16.xpose.msra.mxu0 %v839
        %965 = vmatprep.subr.bf16.mxu0 %v842
        %966 = vmatpush1.bf16.xpose.msra.mxu0 %v841
        %967 = vmatprep.subr.bf16.mxu0 %v844
        %968 = vmatpush1.bf16.xpose.msra.mxu0 %v843
        %969 = vmatprep.subr.bf16.mxu0 %v846
        %970 = vmatpush1.bf16.xpose.msra.mxu0 %v845
        %971 = vmatprep.subr.bf16.mxu0 %v848
        %972 = vmatpush1.bf16.xpose.msra.mxu0 %v847
        %973 = vmatprep.subr.bf16.mxu0 %v850
        %974 = vmatpush1.bf16.xpose.msra.mxu0 %v849
        %975 = vmatprep.subr.bf16.mxu0 %v852
        %976 = vmatpush1.bf16.xpose.msra.mxu0 %v851
        %977 = vmatprep.subr.bf16.mxu0 0
        %978 = vmatpush1.bf16.xpose.msra.mxu0 0
        %979 = vmatprep.subr.bf16.mxu0 0
        %980 = vmatpush1.bf16.xpose.msra.mxu0 0
        %981 = vmatprep.subr.bf16.mxu0 0
        %982 = vmatpush1.bf16.xpose.msra.mxu0 0
        %983 = vmatprep.subr.bf16.mxu0 0
        %984 = vmatpush1.bf16.xpose.msra.mxu0 0
        %985 = vmatprep.subr.bf16.mxu0 0
        %986 = vmatpush1.bf16.xpose.msra.mxu0 0
        %987 = vmatprep.subr.bf16.mxu0 0
        %988 = vmatpush1.bf16.xpose.msra.mxu0 0
        %989 = vmatprep.subr.bf16.mxu0 0
        %990 = vmatpush1.bf16.xpose.msra.mxu0 0
        %991 = vmatprep.subr.bf16.mxu0 0
        %992 = vmatpush1.bf16.xpose.msra.mxu0 0
        %993 = vmatprep.mubr.bf16.mxu0 %v958
        %994 = vmatmul.mubr.bf16.gmra.mrb[0].mxu0 %v957
        %v995 = vpop.f32.mrb[0].mxu0
        %v996 = vadd.f32 0.0, %v995
        %v997 = vpop.f32.mrb[0].mxu0
        %v998 = vpop.f32.mrb[0].mxu0
        %v999 = vadd.f32 0.0, %v998
        %v1000 = vpop.f32.mrb[0].mxu0
        %1001 = vdwg.mxu0
        %s1002 = sld [smem:[#allocation2]]
        %v1003 = vstv %s1002
        %v1004 = vmul.f32 %v1003, %v996
        %v1005 = vmul.f32 %v1003, %v999
        %v1006 = vld [vmem:[%s372] sm:$0xff]
        %v1007 = vld [vmem:[%s372 + $0x8] sm:$0xff]
        %v1008 = vadd.f32 %v1004, %v1006
        %v1009 = vadd.f32 %v1005, %v1007
        %1010 = vst [vmem:[%s413] sm:$0xff] %v1008
        %1011 = vst [vmem:[%s413 + $0x8] sm:$0xff] %v1009
        %s1012 = sand.u32 %s185, 1
        %s1013 = scalar_lea.sflag [#allocation5], %s1012
        %s1014 = sand.u32 %s185, 1
        %s1015 = smul.addr %s1014, 16
        %s1016 = scalar_lea.vmem [#allocation11], %s1015
        %s1017 = sand.u32 %s213, 1
        %s1018 = scalar_lea.sflag [#allocation13], %s1017
        %s1019 = sand.u32 %s213, 1
        %s1020 = smul.addr %s1019, 128
        %s1021 = scalar_lea.vmem [#allocation12], %s1020
        // Predicated region
        $region57: #{tpu_custom_call.1} parent=39 // pred_check
          %p1022 = pneg %p195
        $region58: #{tpu_custom_call.1} parent=39 // pred_check_branch
          %1024 = sbr.rel (%p1022) target = $region60
        $region59: #{tpu_custom_call.1} parent=39 // pred_region
          %s1026 = ssub.s32 256, 256
          %1027 = vsyncadd %s1013, %s1026
          %s1028 = smul.addr %s38, 4
          %s1029 = sadd.s32 %s39, %s1028
          %s1030 = smul.addr %s1029, 128
          %s1031 = scalar_lea.hbm %s5, %s1030
          %s1032 = sshll.u32 %s1016, 4
          %s1033 = int_to_ptr.vmem [resolvable:$true] %s1032
          %1038 = dma.vmem_to_hbm [thread:$0]  %s1033, 256, %s1031, %s1013, 128, 256, 8
        $region60: #{tpu_custom_call.1} parent=39 // pred_fallthru
          _
        // Predicated region
        $region61: #{tpu_custom_call.1} parent=39 // pred_check
          %p1039 = pneg %p223
        $region62: #{tpu_custom_call.1} parent=39 // pred_check_branch
          %1041 = sbr.rel (%p1039) target = $region64
        $region63: #{tpu_custom_call.1} parent=39 // pred_region
          %s1042 = smul.u32 16, %s39
          %s1044 = ssub.s32 2048, 2048
          %1045 = vsyncadd %s1018, %s1044
          %s1046 = smul.addr %s1042, 2
          %s1047 = smul.addr %s38, 64
          %s1048 = sadd.s32 %s1046, %s1047
          %s1049 = smul.addr %s1048, 64
          %s1050 = scalar_lea.hbm %s6, %s1049
          %s1051 = sshll.u32 %s1021, 4
          %s1052 = int_to_ptr.vmem [resolvable:$true] %s1051
          %1057 = dma.vmem_to_hbm [thread:$0]  %s1052, 2048, %s1050, %s1018, 128, 128, 8
        $region64: #{tpu_custom_call.1} parent=39 // pred_fallthru
          _
      $region40: #{tpu_custom_call.1} parent=5 // pred_fallthru
        _
      %p1058 = scmp.le.s32.totalorder 2, %s29
      // Predicated region
      $region65: #{tpu_custom_call.1} parent=5 // pred_check
        %p1059 = pneg %p1058
      $region66: #{tpu_custom_call.1} parent=5 // pred_check_branch
        %1061 = sbr.rel (%p1059) target = $region68
      $region67: #{tpu_custom_call.1} parent=5 // pred_region
        %s1062 = ssub.s32 %s29, 2
        // Predicated region
        $region69: #{tpu_custom_call.1} parent=67 // pred_check
          %p1063 = pneg %p201
        $region70: #{tpu_custom_call.1} parent=67 // pred_check_branch
          %1065 = sbr.rel (%p1063) target = $region72
        $region71: #{tpu_custom_call.1} parent=67 // pred_region
          %s1066 = sand.u32 %s186, 1
          %s1067 = scalar_lea.sflag [#allocation5], %s1066
          %s1068 = sand.u32 %s186, 1
          %s1069 = smul.addr %s1068, 16
          %s1070 = scalar_lea.vmem [#allocation11], %s1069
          %1071 = dma.done %s1067, 256
        $region72: #{tpu_custom_call.1} parent=67 // pred_fallthru
          _
        // Predicated region
        $region73: #{tpu_custom_call.1} parent=67 // pred_check
          %p1072 = pneg %p229
        $region74: #{tpu_custom_call.1} parent=67 // pred_check_branch
          %1074 = sbr.rel (%p1072) target = $region76
        $region75: #{tpu_custom_call.1} parent=67 // pred_region
          %s1075 = sand.u32 %s214, 1
          %s1076 = scalar_lea.sflag [#allocation13], %s1075
          %s1077 = sand.u32 %s214, 1
          %s1078 = smul.addr %s1077, 128
          %s1079 = scalar_lea.vmem [#allocation12], %s1078
          %1080 = dma.done %s1076, 2048
        $region76: #{tpu_custom_call.1} parent=67 // pred_fallthru
          _
      $region68: #{tpu_custom_call.1} parent=5 // pred_fallthru
        _
    $region6: #{tpu_custom_call.1} parent=1 // loop_footer
      %s33 = sadd.s32 1, %s29
    $region7: #{tpu_custom_call.1} parent=1 // loop_footer_branch
      %28 = sbr.rel target = $region3
    $region8: #{tpu_custom_call.1} parent=1 // loop_exit
      _
    %1081 = vsyncpa [#allocation4], 1
    %s1082 = scalar_lea.sflag [#allocation4], 1
    %1083 = vsyncpa %s1082, 1
    %1084 = vsyncpa [#allocation7], 1
    %s1085 = scalar_lea.sflag [#allocation7], 1
    %1086 = vsyncpa %s1085, 1
    %1087 = vsyncpa [#allocation10], 1
    %s1088 = scalar_lea.sflag [#allocation10], 1
    %1089 = vsyncpa %s1088, 1
    %1090 = vsyncpa [#allocation5], 1
    %s1091 = scalar_lea.sflag [#allocation5], 1
    %1092 = vsyncpa %s1091, 1
    %1093 = vsyncpa [#allocation13], 1
    %s1094 = scalar_lea.sflag [#allocation13], 1
    %1095 = vsyncpa %s1094, 1

</llo_original>
